<compile_context>
chip_gen: v7x
topology: tpu7x:2x2x1
jax: 0.10.0
libtpu: 0.0.40
codegen_flags: <defaults>
</compile_context>

<pallas_src>
import jax
import jax.numpy as jnp
from jax.experimental import pallas as pl
from jax.experimental.pallas import tpu as pltpu


def cnn1d_kernel(x_ref, w1_ref, b1_ref, w2_ref, b2_ref, wfc_ref, bfc_ref, out_ref):
    """Forward pass for one batch tile; all operands resident in VMEM / vregs.

    x_ref  : (Bt, L, Cin)   channels-last input tile
    w1_ref : (K*Cin, F)     conv1 weights, tap-major fused contraction
    b1_ref : (1, F)
    w2_ref : (K*F, F)       conv2 weights, tap-major fused contraction
    b2_ref : (1, F)
    wfc_ref: (F, NCP)       fc weights, pre-scaled by 1/L, lane-padded to NCP
    bfc_ref: (1, NCP)
    out_ref: (Bt, NCP)      lane-dense logits (NCP = num_classes padded to 128)
    """
    Bt, L, Cin = x_ref.shape
    F = b1_ref.shape[1]
    K = w1_ref.shape[0] // Cin
    pad = K // 2  # odd K only (asserted in wrapper)

    def taps(v):
        # v: (Bt, L, C) -> im2col (Bt*L, K*C).
        # One sublane zero-pad concat + K static shifted slices + one lane concat,
        # all in vregs (K is tiny & static -> fully unrolled).
        Btv, Lv, C = v.shape
        z = jnp.zeros((Btv, pad, C), v.dtype)
        vp = jnp.concatenate([z, v, z], axis=1)                 # (Bt, L+2*pad, C)
        parts = [vp[:, k:k + Lv, :] for k in range(K)]          # tap k -> offset k-pad
        return jnp.concatenate(parts, axis=-1).reshape(Btv * Lv, K * C)

    x = x_ref[...]

    # ---- conv1 + bias + ReLU: single matmul, contraction = K*Cin ----
    h1 = jnp.maximum(
        jnp.dot(taps(x), w1_ref[...], preferred_element_type=jnp.float32)
        + b1_ref[...], 0.0)                                     # (Bt*L, F)

    # ---- conv2 + bias + ReLU: single matmul, contraction = K*F ----
    h2 = jnp.maximum(
        jnp.dot(taps(h1.reshape(Bt, L, F)), w2_ref[...],
                preferred_element_type=jnp.float32)
        + b2_ref[...], 0.0)                                     # (Bt*L, F)

    # ---- AdaptiveAvgPool1d(1): 1/L folded into wfc, so just sum over L ----
    pooled = h2.reshape(Bt, L, F).sum(axis=1)                   # (Bt, F)

    # ---- fc: (Bt, F) @ (F, NCP) + bias, lane-dense store ----
    out_ref[...] = (jnp.dot(pooled, wfc_ref[...], preferred_element_type=jnp.float32)
                    + bfc_ref[...]).astype(out_ref.dtype)


def cnn1d_classifier_pallas(x, w1_t, b1, w2_t, b2, wfc_t, bfc, kernel_size=3):
    """x: (B, L, input_dim). Weights in PyTorch layouts:
       w1_t: (F, Cin, K), b1: (F,), w2_t: (F, F, K), b2: (F,),
       wfc_t: (NC, F), bfc: (NC,)."""
    B, L, Cin = x.shape
    F = w1_t.shape[0]
    NC = wfc_t.shape[0]
    K = kernel_size
    assert K % 2 == 1, "only odd kernel_size matches Conv1d(padding=K//2) semantics"
    assert w1_t.shape == (F, Cin, K) and w2_t.shape == (F, F, K)

    # Lane-dense output width (num_classes padded to a multiple of 128).
    NCP = max(128, ((NC + 127) // 128) * 128)

    # --- weight prep: tap-major fused contraction layouts ---
    w1 = jnp.transpose(w1_t, (2, 1, 0)).reshape(K * Cin, F).astype(jnp.float32)
    w2 = jnp.transpose(w2_t, (2, 1, 0)).reshape(K * F, F).astype(jnp.float32)
    # Fold AdaptiveAvgPool's 1/L into the fc weight; pad to lane-dense NCP.
    wfc = (jnp.transpose(wfc_t, (1, 0)).astype(jnp.float32) / jnp.float32(L))
    wfc = jnp.pad(wfc, ((0, 0), (0, NCP - NC)))
    bfc_p = jnp.pad(bfc.reshape(1, NC).astype(jnp.float32), ((0, 0), (0, NCP - NC)))
    b1_ = b1.reshape(1, F).astype(jnp.float32)
    b2_ = b2.reshape(1, F).astype(jnp.float32)
    x = x.astype(jnp.float32)

    # --- batch grid: whole batch for tiny B; otherwise tile (weights stay resident) ---
    Bt = B if B <= 8 else 8
    if B % Bt != 0:
        Bt = B
    grid = (B // Bt,)

    flops = 2 * B * L * (K * Cin * F + K * F * F) + 2 * B * F * NCP
    bytes_accessed = 4 * (x.size + w1.size + w2.size + wfc.size
                          + b1_.size + b2_.size + bfc_p.size + B * NCP)

    out = pl.pallas_call(
        cnn1d_kernel,
        out_shape=jax.ShapeDtypeStruct((B, NCP), jnp.float32),
        grid_spec=pltpu.PrefetchScalarGridSpec(
            num_scalar_prefetch=0,
            grid=grid,
            in_specs=[
                pl.BlockSpec((Bt, L, Cin), lambda b: (b, 0, 0)),   # x: tiled over batch
                pl.BlockSpec((K * Cin, F), lambda b: (0, 0)),      # resident weights
                pl.BlockSpec((1, F), lambda b: (0, 0)),
                pl.BlockSpec((K * F, F), lambda b: (0, 0)),
                pl.BlockSpec((1, F), lambda b: (0, 0)),
                pl.BlockSpec((F, NCP), lambda b: (0, 0)),
                pl.BlockSpec((1, NCP), lambda b: (0, 0)),
            ],
            out_specs=pl.BlockSpec((Bt, NCP), lambda b: (b, 0)),
        ),
        compiler_params=pltpu.CompilerParams(
            dimension_semantics=("parallel",)),
        cost_estimate=pl.CostEstimate(flops=flops, transcendentals=0,
                                      bytes_accessed=bytes_accessed),
    )(x, w1, b1_, w2, b2_, wfc, bfc_p)

    return out[:, :NC]


def reference_forward(x, w1_t, b1, w2_t, b2, wfc_t, bfc):
    """Pure-JAX reference with PyTorch semantics (NCH conv layout)."""
    xt = jnp.transpose(x, (0, 2, 1))  # (B, Cin, L), matches torch transpose(1, 2)
    y = jax.lax.conv_general_dilated(xt, w1_t, (1,), [(1, 1)],
                                     dimension_numbers=('NCH', 'OIH', 'NCH'))
    y = jnp.maximum(y + b1[None, :, None], 0.0)
    y = jax.lax.conv_general_dilated(y, w2_t, (1,), [(1, 1)],
                                     dimension_numbers=('NCH', 'OIH', 'NCH'))
    y = jnp.maximum(y + b2[None, :, None], 0.0)
    y = y.mean(axis=-1)                       # AdaptiveAvgPool1d(1) + squeeze
    return y @ wfc_t.T + bfc


if __name__ == "__main__":
    # Small shapes consistent with the module: x is (batch, seq_len, input_dim)
    B, L, Cin = 2, 16, 8
    F, NC, K = 64, 8, 3

    key = jax.random.PRNGKey(0)
    ks = jax.random.split(key, 7)

    # Deterministic parameter init (PyTorch-default-style uniform scaling).
    def u(k, shape, fan_in):
        bound = 1.0 / jnp.sqrt(fan_in)
        return jax.random.uniform(k, shape, jnp.float32, -bound, bound)

    x = jax.random.normal(ks[0], (B, L, Cin), jnp.float32)
    w1_t = u(ks[1], (F, Cin, K), Cin * K)   # conv1 weight (out, in, K)
    b1 = u(ks[2], (F,), Cin * K)
    w2_t = u(ks[3], (F, F, K), F * K)       # conv2 weight
    b2 = u(ks[4], (F,), F * K)
    wfc_t = u(ks[5], (NC, F), F)            # fc weight (out, in)
    bfc = u(ks[6], (NC,), F)

    out = cnn1d_classifier_pallas(x, w1_t, b1, w2_t, b2, wfc_t, bfc, kernel_size=K)
    out = jax.block_until_ready(out)

    ref = reference_forward(x, w1_t, b1, w2_t, b2, wfc_t, bfc)
    assert out.shape == (B, NC)
    assert jnp.allclose(out, ref, atol=1e-4, rtol=1e-4), (
        f"mismatch: max abs err {jnp.max(jnp.abs(out - ref))}")

    print("KERNEL_OK")
</pallas_src>

<mosaic_0001>
module attributes {stable_mosaic.version = 11 : i64} {
  func.func @cnn1d_kernel(%arg0: i32, %arg1: memref<2x16x8xf32, #tpu.memory_space<vmem>>, %arg2: memref<24x64xf32, #tpu.memory_space<vmem>>, %arg3: memref<1x64xf32, #tpu.memory_space<vmem>>, %arg4: memref<192x64xf32, #tpu.memory_space<vmem>>, %arg5: memref<1x64xf32, #tpu.memory_space<vmem>>, %arg6: memref<64x128xf32, #tpu.memory_space<vmem>>, %arg7: memref<1x128xf32, #tpu.memory_space<vmem>>, %arg8: memref<2x128xf32, #tpu.memory_space<vmem>>) attributes {dimension_semantics = [#tpu.dimension_semantics<parallel>], iteration_bounds = array<i64: 1>, scalar_prefetch = 0 : i64, scratch_operands = 0 : i64, tpu.core_type = #tpu.core_type<tc>, window_params = [{transform_indices = @transform_0, window_bounds = array<i64: 2, 16, 8>}, {pipeline_mode = #tpu.pipeline_mode<synchronous>, transform_indices = @transform_1, window_bounds = array<i64: 24, 64>}, {pipeline_mode = #tpu.pipeline_mode<synchronous>, transform_indices = @transform_2, window_bounds = array<i64: 1, 64>}, {pipeline_mode = #tpu.pipeline_mode<synchronous>, transform_indices = @transform_3, window_bounds = array<i64: 192, 64>}, {pipeline_mode = #tpu.pipeline_mode<synchronous>, transform_indices = @transform_4, window_bounds = array<i64: 1, 64>}, {pipeline_mode = #tpu.pipeline_mode<synchronous>, transform_indices = @transform_5, window_bounds = array<i64: 64, 128>}, {pipeline_mode = #tpu.pipeline_mode<synchronous>, transform_indices = @transform_6, window_bounds = array<i64: 1, 128>}, {transform_indices = @transform_7, window_bounds = array<i64: 2, 128>}]} {
    %c0 = arith.constant 0 : index
    %c0_0 = arith.constant 0 : index
    %c0_1 = arith.constant 0 : index
    %0 = vector.load %arg1[%c0, %c0_0, %c0_1] : memref<2x16x8xf32, #tpu.memory_space<vmem>>, vector<2x16x8xf32>
    %cst = arith.constant 0.000000e+00 : f32
    %1 = vector.broadcast %cst : f32 to vector<2x1x8xf32>
    %2 = tpu.concatenate %1, %0, %1 in 1 : vector<2x1x8xf32>, vector<2x16x8xf32>, vector<2x1x8xf32> -> vector<2x18x8xf32>
    %3 = vector.extract_strided_slice %2 {offsets = [0, 0, 0], sizes = [2, 16, 8], strides = [1, 1, 1]} : vector<2x18x8xf32> to vector<2x16x8xf32>
    %4 = vector.extract_strided_slice %2 {offsets = [0, 1, 0], sizes = [2, 16, 8], strides = [1, 1, 1]} : vector<2x18x8xf32> to vector<2x16x8xf32>
    %5 = vector.extract_strided_slice %2 {offsets = [0, 2, 0], sizes = [2, 16, 8], strides = [1, 1, 1]} : vector<2x18x8xf32> to vector<2x16x8xf32>
    %6 = tpu.concatenate %3, %4, %5 in 2 : vector<2x16x8xf32>, vector<2x16x8xf32>, vector<2x16x8xf32> -> vector<2x16x24xf32>
    %7 = vector.shape_cast %6 : vector<2x16x24xf32> to vector<32x24xf32>
    %c0_2 = arith.constant 0 : index
    %c0_3 = arith.constant 0 : index
    %8 = vector.load %arg2[%c0_2, %c0_3] : memref<24x64xf32, #tpu.memory_space<vmem>>, vector<24x64xf32>
    %cst_4 = arith.constant dense<0.000000e+00> : vector<32x64xf32>
    %9 = tpu.matmul %7, %8, %cst_4 {dimension_numbers = #tpu.dot_dimension_numbers<[1], [0], [0], [1], [0, 0, 1, 1], [], []>} : vector<32x24xf32>, vector<24x64xf32>, vector<32x64xf32> -> vector<32x64xf32>
    %c0_5 = arith.constant 0 : index
    %c0_6 = arith.constant 0 : index
    %10 = vector.load %arg3[%c0_5, %c0_6] : memref<1x64xf32, #tpu.memory_space<vmem>>, vector<1x64xf32>
    %11 = vector.broadcast %10 : vector<1x64xf32> to vector<32x64xf32>
    %12 = arith.addf %9, %11 : vector<32x64xf32>
    %cst_7 = arith.constant 0.000000e+00 : f32
    %13 = vector.broadcast %cst_7 : f32 to vector<32x64xf32>
    %14 = arith.maximumf %12, %13 : vector<32x64xf32>
    %15 = vector.shape_cast %14 : vector<32x64xf32> to vector<2x16x64xf32>
    %cst_8 = arith.constant 0.000000e+00 : f32
    %16 = vector.broadcast %cst_8 : f32 to vector<2x1x64xf32>
    %17 = tpu.concatenate %16, %15, %16 in 1 : vector<2x1x64xf32>, vector<2x16x64xf32>, vector<2x1x64xf32> -> vector<2x18x64xf32>
    %18 = vector.extract_strided_slice %17 {offsets = [0, 0, 0], sizes = [2, 16, 64], strides = [1, 1, 1]} : vector<2x18x64xf32> to vector<2x16x64xf32>
    %19 = vector.extract_strided_slice %17 {offsets = [0, 1, 0], sizes = [2, 16, 64], strides = [1, 1, 1]} : vector<2x18x64xf32> to vector<2x16x64xf32>
    %20 = vector.extract_strided_slice %17 {offsets = [0, 2, 0], sizes = [2, 16, 64], strides = [1, 1, 1]} : vector<2x18x64xf32> to vector<2x16x64xf32>
    %21 = tpu.concatenate %18, %19, %20 in 2 : vector<2x16x64xf32>, vector<2x16x64xf32>, vector<2x16x64xf32> -> vector<2x16x192xf32>
    %22 = vector.shape_cast %21 : vector<2x16x192xf32> to vector<32x192xf32>
    %c0_9 = arith.constant 0 : index
    %c0_10 = arith.constant 0 : index
    %23 = vector.load %arg4[%c0_9, %c0_10] : memref<192x64xf32, #tpu.memory_space<vmem>>, vector<192x64xf32>
    %cst_11 = arith.constant dense<0.000000e+00> : vector<32x64xf32>
    %24 = tpu.matmul %22, %23, %cst_11 {dimension_numbers = #tpu.dot_dimension_numbers<[1], [0], [0], [1], [0, 0, 1, 1], [], []>} : vector<32x192xf32>, vector<192x64xf32>, vector<32x64xf32> -> vector<32x64xf32>
    %c0_12 = arith.constant 0 : index
    %c0_13 = arith.constant 0 : index
    %25 = vector.load %arg5[%c0_12, %c0_13] : memref<1x64xf32, #tpu.memory_space<vmem>>, vector<1x64xf32>
    %26 = vector.broadcast %25 : vector<1x64xf32> to vector<32x64xf32>
    %27 = arith.addf %24, %26 : vector<32x64xf32>
    %cst_14 = arith.constant 0.000000e+00 : f32
    %28 = vector.broadcast %cst_14 : f32 to vector<32x64xf32>
    %29 = arith.maximumf %27, %28 : vector<32x64xf32>
    %30 = vector.shape_cast %29 : vector<32x64xf32> to vector<2x16x64xf32>
    %cst_15 = arith.constant dense<0.000000e+00> : vector<2x64xf32>
    %31 = vector.multi_reduction <add>, %30, %cst_15 [1] : vector<2x16x64xf32> to vector<2x64xf32>
    %c0_16 = arith.constant 0 : index
    %c0_17 = arith.constant 0 : index
    %32 = vector.load %arg6[%c0_16, %c0_17] : memref<64x128xf32, #tpu.memory_space<vmem>>, vector<64x128xf32>
    %cst_18 = arith.constant dense<0.000000e+00> : vector<2x128xf32>
    %33 = tpu.matmul %31, %32, %cst_18 {dimension_numbers = #tpu.dot_dimension_numbers<[1], [0], [0], [1], [0, 0, 1, 1], [], []>} : vector<2x64xf32>, vector<64x128xf32>, vector<2x128xf32> -> vector<2x128xf32>
    %c0_19 = arith.constant 0 : index
    %c0_20 = arith.constant 0 : index
    %34 = vector.load %arg7[%c0_19, %c0_20] : memref<1x128xf32, #tpu.memory_space<vmem>>, vector<1x128xf32>
    %35 = vector.broadcast %34 : vector<1x128xf32> to vector<2x128xf32>
    %36 = arith.addf %33, %35 : vector<2x128xf32>
    %c0_21 = arith.constant 0 : index
    %c0_22 = arith.constant 0 : index
    %37 = vector.load %arg8[%c0_21, %c0_22] : memref<2x128xf32, #tpu.memory_space<vmem>>, vector<2x128xf32>
    tpu.vector_store %arg8[%c0_21, %c0_22], %36 {strides = array<i32>} : memref<2x128xf32, #tpu.memory_space<vmem>>, vector<2x128xf32>,
    return
  }
  func.func @transform_0(%arg0: i32) -> (i32, i32, i32) {
    %c0_i32 = arith.constant 0 : i32
    %c0_i32_0 = arith.constant 0 : i32
    %c0_i32_1 = arith.constant 0 : i32
    return %arg0, %c0_i32, %c0_i32_0 : i32, i32, i32
  }
  func.func @transform_1(%arg0: i32) -> (i32, i32) {
    %c0_i32 = arith.constant 0 : i32
    %c0_i32_0 = arith.constant 0 : i32
    %c0_i32_1 = arith.constant 0 : i32
    return %c0_i32, %c0_i32_0 : i32, i32
  }
  func.func @transform_2(%arg0: i32) -> (i32, i32) {
    %c0_i32 = arith.constant 0 : i32
    %c0_i32_0 = arith.constant 0 : i32
    %c0_i32_1 = arith.constant 0 : i32
    return %c0_i32, %c0_i32_0 : i32, i32
  }
  func.func @transform_3(%arg0: i32) -> (i32, i32) {
    %c0_i32 = arith.constant 0 : i32
    %c0_i32_0 = arith.constant 0 : i32
    %c0_i32_1 = arith.constant 0 : i32
    return %c0_i32, %c0_i32_0 : i32, i32
  }
  func.func @transform_4(%arg0: i32) -> (i32, i32) {
    %c0_i32 = arith.constant 0 : i32
    %c0_i32_0 = arith.constant 0 : i32
    %c0_i32_1 = arith.constant 0 : i32
    return %c0_i32, %c0_i32_0 : i32, i32
  }
  func.func @transform_5(%arg0: i32) -> (i32, i32) {
    %c0_i32 = arith.constant 0 : i32
    %c0_i32_0 = arith.constant 0 : i32
    %c0_i32_1 = arith.constant 0 : i32
    return %c0_i32, %c0_i32_0 : i32, i32
  }
  func.func @transform_6(%arg0: i32) -> (i32, i32) {
    %c0_i32 = arith.constant 0 : i32
    %c0_i32_0 = arith.constant 0 : i32
    %c0_i32_1 = arith.constant 0 : i32
    return %c0_i32, %c0_i32_0 : i32, i32
  }
  func.func @transform_7(%arg0: i32) -> (i32, i32) {
    %c0_i32 = arith.constant 0 : i32
    %c0_i32_0 = arith.constant 0 : i32
    return %arg0, %c0_i32 : i32, i32
  }
}

</mosaic_0001>

<llo_original>
// kernel: tpu_custom_call.1
$region0: #{tpu_custom_call.1}
  #allocation0 [shape = 'u32[]', space=smem, size = 0x4, offset = 0x4, fixed_abs, tag = 'smem constant byte address 0x4 - core index']
  #allocation1 [shape = 'u32[144,128]{1,0:T(1,128)}', space=vmem, size = 0x12000, scoped, tag = 'internal scratch']
  %s0 = inlined_call_operand.vmem [shape: f32[2,16,8], index: 0, kind: input, shape index: {}]
  %s1 = inlined_call_operand.vmem [shape: f32[24,64], index: 1, kind: input, shape index: {}]
  %s2 = inlined_call_operand.vmem [shape: f32[1,64], index: 2, kind: input, shape index: {}]
  %s3 = inlined_call_operand.vmem [shape: f32[192,64], index: 3, kind: input, shape index: {}]
  %s4 = inlined_call_operand.vmem [shape: f32[1,64], index: 4, kind: input, shape index: {}]
  %s5 = inlined_call_operand.vmem [shape: f32[64,128], index: 5, kind: input, shape index: {}]
  %s6 = inlined_call_operand.vmem [shape: f32[1,128], index: 6, kind: input, shape index: {}]
  %s7 = inlined_call_operand.hbm [shape: f32[2,128], index: 7, kind: output, shape index: {}]
  %s8 = sld [smem:[#allocation0]]
  $region38: #{tpu_custom_call.1} parent=0
    _
  %s10 = ssub.s32 1, %s8
  %s11 = scalar_select 0, %s10, %s8
  $region1: #{tpu_custom_call.1} parent=0
    #allocation2 [shape = 'u8[1024]{0}', space=vmem, size = 0x400, scoped, tag = 'output window, operand 0, single buffered']
    #allocation3 [shape = 's32[1]{0}', space=sflag, size = 0x4, scoped, tag = 'scoped memory for tpu_custom_call.1']
    %12 = vsyncpa [#allocation3], 0
    // Predicated region
    $region2: #{tpu_custom_call.1} parent=1 // pred_check
      _
    $region3: #{tpu_custom_call.1} parent=1 // pred_check_branch
      %14 = sbr.rel (0) target = $region5
    $region4: #{tpu_custom_call.1} parent=1 // pred_region
      _
    $region5: #{tpu_custom_call.1} parent=1 // pred_fallthru
      _
    // Predicated region
    $region6: #{tpu_custom_call.1} parent=1 // pred_check
      _
    $region7: #{tpu_custom_call.1} parent=1 // pred_check_branch
      %16 = sbr.rel (0) target = $region9
    $region8: #{tpu_custom_call.1} parent=1 // pred_region
      _
    $region9: #{tpu_custom_call.1} parent=1 // pred_fallthru
      _
    // Predicated region
    $region10: #{tpu_custom_call.1} parent=1 // pred_check
      _
    $region11: #{tpu_custom_call.1} parent=1 // pred_check_branch
      %18 = sbr.rel (0) target = $region13
    $region12: #{tpu_custom_call.1} parent=1 // pred_region
      _
    $region13: #{tpu_custom_call.1} parent=1 // pred_fallthru
      _
    // Predicated region
    $region14: #{tpu_custom_call.1} parent=1 // pred_check
      _
    $region15: #{tpu_custom_call.1} parent=1 // pred_check_branch
      %20 = sbr.rel (0) target = $region17
    $region16: #{tpu_custom_call.1} parent=1 // pred_region
      _
    $region17: #{tpu_custom_call.1} parent=1 // pred_fallthru
      _
    // Predicated region
    $region18: #{tpu_custom_call.1} parent=1 // pred_check
      _
    $region19: #{tpu_custom_call.1} parent=1 // pred_check_branch
      %22 = sbr.rel (0) target = $region21
    $region20: #{tpu_custom_call.1} parent=1 // pred_region
      _
    $region21: #{tpu_custom_call.1} parent=1 // pred_fallthru
      _
    // Predicated region
    $region22: #{tpu_custom_call.1} parent=1 // pred_check
      _
    $region23: #{tpu_custom_call.1} parent=1 // pred_check_branch
      %24 = sbr.rel (0) target = $region25
    $region24: #{tpu_custom_call.1} parent=1 // pred_region
      _
    $region25: #{tpu_custom_call.1} parent=1 // pred_fallthru
      _
    // Predicated region
    $region26: #{tpu_custom_call.1} parent=1 // pred_check
      _
    $region27: #{tpu_custom_call.1} parent=1 // pred_check_branch
      %26 = sbr.rel (0) target = $region29
    $region28: #{tpu_custom_call.1} parent=1 // pred_region
      _
    $region29: #{tpu_custom_call.1} parent=1 // pred_fallthru
      _
    %v27 = vld [vmem:[%s0] sm:$0xff]
    %v28 = vld [vmem:[%s0 + $0x8] sm:$0xff]
    %v29 = vld [vmem:[%s0 + $0x10] sm:$0xff]
    %v30 = vld [vmem:[%s0 + $0x18] sm:$0xff]
    %vm35 = vcmask 1040384
    %v36 = vrot.slane %v27, 7
    %v37 = vrot.slane %v28, 7
    %v38 = vsel %vm35, %v36, %v37
    %v39 = vrot.slane %v29, 7
    %v40 = vrot.slane %v30, 7
    %v41 = vsel %vm35, %v39, %v40
    %v48 = vsel %vm35, 0.0, %v36
    %v49 = vsel %vm35, 0.0, %v39
    %v50 = vsel %vm35, %v37, 0.0
    %v51 = vsel %vm35, %v40, 0.0
    %vm56 = vcmask 1046528
    %v57 = vrot.slane %v48, 1
    %v58 = vrot.slane %v38, 1
    %v59 = vsel %vm56, %v57, %v58
    %v60 = vrot.slane %v50, 1
    %v61 = vsel %vm56, %v58, %v60
    %v62 = vrot.slane %v49, 1
    %v63 = vrot.slane %v41, 1
    %v64 = vsel %vm56, %v62, %v63
    %v65 = vrot.slane %v51, 1
    %v66 = vsel %vm56, %v63, %v65
    %67 = vrot.lane.b32.xlu0 %v59, 8
    %v68 = vpop.permute.xlu0 %67
    %69 = vrot.lane.b32.xlu0 %v61, 8
    %v70 = vpop.permute.xlu0 %69
    %71 = vrot.lane.b32.xlu0 %v64, 8
    %v72 = vpop.permute.xlu0 %71
    %73 = vrot.lane.b32.xlu0 %v66, 8
    %v74 = vpop.permute.xlu0 %73
    %vm79 = vcmask 1045504
    %v80 = vrot.slane %v48, 2
    %v81 = vrot.slane %v38, 2
    %v82 = vsel %vm79, %v80, %v81
    %v83 = vrot.slane %v50, 2
    %v84 = vsel %vm79, %v81, %v83
    %v85 = vrot.slane %v49, 2
    %v86 = vrot.slane %v41, 2
    %v87 = vsel %vm79, %v85, %v86
    %v88 = vrot.slane %v51, 2
    %v89 = vsel %vm79, %v86, %v88
    %90 = vrot.lane.b32.xlu0 %v82, 16
    %v91 = vpop.permute.xlu0 %90
    %92 = vrot.lane.b32.xlu0 %v84, 16
    %v93 = vpop.permute.xlu0 %92
    %94 = vrot.lane.b32.xlu0 %v87, 16
    %v95 = vpop.permute.xlu0 %94
    %96 = vrot.lane.b32.xlu0 %v89, 16
    %v97 = vpop.permute.xlu0 %96
    %vm102 = vcmask 64512
    %v103 = vsel %vm102, %v48, %v68
    %v104 = vsel %vm102, %v38, %v70
    %v105 = vsel %vm102, %v49, %v72
    %v106 = vsel %vm102, %v41, %v74
    %vm107 = vcmask 130048
    %v108 = vsel %vm107, %v103, %v91
    %v109 = vsel %vm107, %v104, %v93
    %v110 = vsel %vm107, %v105, %v95
    %v111 = vsel %vm107, %v106, %v97
    %v112 = vld [vmem:[%s1] sm:$0xff]
    %v113 = vld [vmem:[%s1 + $0x8] sm:$0xff]
    %v114 = vld [vmem:[%s1 + $0x10] sm:$0xff]
    %v115 = vld [vmem:[%s2] sm:$0x1]
    %v117 = vlaneseq
    %v118 = vshrl.u32 %v117, 7
    %v119 = vsub.s32 0, %v118
    %v120 = vrot.slane %v115, %v119
    %vm122 = vcmask 195584
    %v124 = vsel %vm122, %v108, 0
    %v127 = vsel %vm122, %v109, 0
    %v130 = vsel %vm122, %v110, 0
    %v133 = vsel %vm122, %v111, 0
    %135 = vmatprep.subr.mxu0 0.0
    %136 = vmatpush1.msra.mxu0 %v112
    %137 = vmatprep.subr.mxu0 0.0
    %138 = vmatpush1.msra.mxu0 %v113
    %139 = vmatprep.subr.mxu0 0.0
    %140 = vmatpush1.msra.mxu0 %v114
    %141 = vmatprep.subr.mxu0 0.0
    %142 = vmatpush1.msra.mxu0 0.0
    %143 = vmatprep.subr.mxu0 0.0
    %144 = vmatpush1.msra.mxu0 0.0
    %145 = vmatprep.subr.mxu0 0.0
    %146 = vmatpush1.msra.mxu0 0.0
    %147 = vmatprep.subr.mxu0 0.0
    %148 = vmatpush1.msra.mxu0 0.0
    %149 = vmatprep.subr.mxu0 0.0
    %150 = vmatpush1.msra.mxu0 0.0
    %151 = vmatprep.subr.mxu0 0.0
    %152 = vmatpush1.msra.mxu0 0.0
    %153 = vmatprep.subr.mxu0 0.0
    %154 = vmatpush1.msra.mxu0 0.0
    %155 = vmatprep.subr.mxu0 0.0
    %156 = vmatpush1.msra.mxu0 0.0
    %157 = vmatprep.subr.mxu0 0.0
    %158 = vmatpush1.msra.mxu0 0.0
    %159 = vmatprep.subr.mxu0 0.0
    %160 = vmatpush1.msra.mxu0 0.0
    %161 = vmatprep.subr.mxu0 0.0
    %162 = vmatpush1.msra.mxu0 0.0
    %163 = vmatprep.subr.mxu0 0.0
    %164 = vmatpush1.msra.mxu0 0.0
    %165 = vmatprep.subr.mxu0 0.0
    %166 = vmatpush1.msra.mxu0 0.0
    %167 = vmatprep.subr.mxu0 0.0
    %168 = vmatpush1.msra.mxu0 0.0
    %169 = vmatprep.subr.mxu0 0.0
    %170 = vmatpush1.msra.mxu0 0.0
    %171 = vmatprep.subr.mxu0 0.0
    %172 = vmatpush1.msra.mxu0 0.0
    %173 = vmatprep.subr.mxu0 0.0
    %174 = vmatpush1.msra.mxu0 0.0
    %175 = vmatprep.subr.mxu0 0.0
    %176 = vmatpush1.msra.mxu0 0.0
    %177 = vmatprep.subr.mxu0 0.0
    %178 = vmatpush1.msra.mxu0 0.0
    %179 = vmatprep.subr.mxu0 0.0
    %180 = vmatpush1.msra.mxu0 0.0
    %181 = vmatprep.subr.mxu0 0.0
    %182 = vmatpush1.msra.mxu0 0.0
    %183 = vmatprep.subr.mxu0 0.0
    %184 = vmatpush1.msra.mxu0 0.0
    %185 = vmatprep.subr.mxu0 0.0
    %186 = vmatpush1.msra.mxu0 0.0
    %187 = vmatprep.subr.mxu0 0.0
    %188 = vmatpush1.msra.mxu0 0.0
    %189 = vmatprep.subr.mxu0 0.0
    %190 = vmatpush1.msra.mxu0 0.0
    %191 = vmatprep.subr.mxu0 0.0
    %192 = vmatpush1.msra.mxu0 0.0
    %193 = vmatprep.subr.mxu0 0.0
    %194 = vmatpush1.msra.mxu0 0.0
    %195 = vmatprep.subr.mxu0 0.0
    %196 = vmatpush1.msra.mxu0 0.0
    %197 = vmatprep.subr.mxu0 0.0
    %198 = vmatpush1.msra.mxu0 0.0
    %199 = vmatprep.mubr.f32.mxu0 0.0
    %200 = vmatmul.mubr.f32.gmra.mrb[0].mxu0 %v124
    %v201 = vpop.f32.mrb[0].mxu0
    %v202 = vadd.f32 %v120, %v201
    %v203 = vpop.f32.mrb[0].mxu0
    %204 = vmatprep.mubr.f32.mxu0 0.0
    %205 = vmatmul.mubr.f32.gmra.mrb[0].mxu0 %v127
    %v206 = vpop.f32.mrb[0].mxu0
    %v207 = vadd.f32 %v120, %v206
    %v208 = vpop.f32.mrb[0].mxu0
    %209 = vmatprep.mubr.f32.mxu0 0.0
    %210 = vmatmul.mubr.f32.gmra.mrb[0].mxu0 %v130
    %v211 = vpop.f32.mrb[0].mxu0
    %v212 = vadd.f32 %v120, %v211
    %v213 = vpop.f32.mrb[0].mxu0
    %214 = vmatprep.mubr.f32.mxu0 0.0
    %215 = vmatmul.mubr.f32.gmra.mrb[0].mxu0 %v133
    %v216 = vpop.f32.mrb[0].mxu0
    %v217 = vadd.f32 %v120, %v216
    %v218 = vpop.f32.mrb[0].mxu0
    %219 = vdwg.mxu0
    %v220 = vmax.f32 %v202, 0.0
    %v221 = vmax.f32 %v207, 0.0
    %v222 = vmax.f32 %v212, 0.0
    %v223 = vmax.f32 %v217, 0.0
    %v228 = vrot.slane %v220, 7
    %v229 = vrot.slane %v221, 7
    %v230 = vsel %vm35, %v228, %v229
    %v231 = vrot.slane %v222, 7
    %v232 = vrot.slane %v223, 7
    %v233 = vsel %vm35, %v231, %v232
    %v240 = vsel %vm35, 0.0, %v228
    %v241 = vsel %vm35, 0.0, %v231
    %v242 = vsel %vm35, %v229, 0.0
    %v243 = vsel %vm35, %v232, 0.0
    %v248 = vrot.slane %v240, 1
    %v249 = vrot.slane %v230, 1
    %v250 = vsel %vm56, %v248, %v249
    %v251 = vrot.slane %v242, 1
    %v252 = vsel %vm56, %v249, %v251
    %v253 = vrot.slane %v241, 1
    %v254 = vrot.slane %v233, 1
    %v255 = vsel %vm56, %v253, %v254
    %v256 = vrot.slane %v243, 1
    %v257 = vsel %vm56, %v254, %v256
    %258 = vrot.lane.b32.xlu0 %v250, 64
    %v259 = vpop.permute.xlu0 %258
    %260 = vrot.lane.b32.xlu0 %v252, 64
    %v261 = vpop.permute.xlu0 %260
    %262 = vrot.lane.b32.xlu0 %v255, 64
    %v263 = vpop.permute.xlu0 %262
    %264 = vrot.lane.b32.xlu0 %v257, 64
    %v265 = vpop.permute.xlu0 %264
    %v270 = vrot.slane %v240, 2
    %v271 = vrot.slane %v230, 2
    %v272 = vsel %vm79, %v270, %v271
    %v273 = vrot.slane %v242, 2
    %v274 = vsel %vm79, %v271, %v273
    %v275 = vrot.slane %v241, 2
    %v276 = vrot.slane %v233, 2
    %v277 = vsel %vm79, %v275, %v276
    %v278 = vrot.slane %v243, 2
    %v279 = vsel %vm79, %v276, %v278
    %vm280 = vcmask 523264
    %v281 = vsel %vm280, %v240, %v259
    %v282 = vsel %vm280, %v230, %v261
    %v283 = vsel %vm280, %v241, %v263
    %v284 = vsel %vm280, %v233, %v265
    %v285 = vld [vmem:[%s3] sm:$0xff]
    %v286 = vld [vmem:[%s3 + $0x8] sm:$0xff]
    %v287 = vld [vmem:[%s3 + $0x10] sm:$0xff]
    %v288 = vld [vmem:[%s3 + $0x18] sm:$0xff]
    %v289 = vld [vmem:[%s3 + $0x20] sm:$0xff]
    %v290 = vld [vmem:[%s3 + $0x28] sm:$0xff]
    %v291 = vld [vmem:[%s3 + $0x30] sm:$0xff]
    %v292 = vld [vmem:[%s3 + $0x38] sm:$0xff]
    %v293 = vld [vmem:[%s3 + $0x40] sm:$0xff]
    %v294 = vld [vmem:[%s3 + $0x48] sm:$0xff]
    %v295 = vld [vmem:[%s3 + $0x50] sm:$0xff]
    %v296 = vld [vmem:[%s3 + $0x58] sm:$0xff]
    %v297 = vld [vmem:[%s3 + $0x60] sm:$0xff]
    %v298 = vld [vmem:[%s3 + $0x68] sm:$0xff]
    %v299 = vld [vmem:[%s3 + $0x70] sm:$0xff]
    %v300 = vld [vmem:[%s3 + $0x78] sm:$0xff]
    %v301 = vld [vmem:[%s3 + $0x80] sm:$0xff]
    %v302 = vld [vmem:[%s3 + $0x88] sm:$0xff]
    %v303 = vld [vmem:[%s3 + $0x90] sm:$0xff]
    %v304 = vld [vmem:[%s3 + $0x98] sm:$0xff]
    %v305 = vld [vmem:[%s3 + $0xa0] sm:$0xff]
    %v306 = vld [vmem:[%s3 + $0xa8] sm:$0xff]
    %v307 = vld [vmem:[%s3 + $0xb0] sm:$0xff]
    %v308 = vld [vmem:[%s3 + $0xb8] sm:$0xff]
    %v309 = vld [vmem:[%s4] sm:$0x1]
    %v311 = vlaneseq
    %v312 = vshrl.u32 %v311, 7
    %v313 = vsub.s32 0, %v312
    %v314 = vrot.slane %v309, %v313
    %v316 = vsel %vm280, %v272, 0
    %v318 = vsel %vm280, %v274, 0
    %v320 = vsel %vm280, %v277, 0
    %v322 = vsel %vm280, %v279, 0
    %324 = vmatprep.subr.mxu0 0.0
    %325 = vmatpush1.msra.mxu0 %v285
    %326 = vmatprep.subr.mxu0 0.0
    %327 = vmatpush1.msra.mxu0 %v286
    %328 = vmatprep.subr.mxu0 0.0
    %329 = vmatpush1.msra.mxu0 %v287
    %330 = vmatprep.subr.mxu0 0.0
    %331 = vmatpush1.msra.mxu0 %v288
    %332 = vmatprep.subr.mxu0 0.0
    %333 = vmatpush1.msra.mxu0 %v289
    %334 = vmatprep.subr.mxu0 0.0
    %335 = vmatpush1.msra.mxu0 %v290
    %336 = vmatprep.subr.mxu0 0.0
    %337 = vmatpush1.msra.mxu0 %v291
    %338 = vmatprep.subr.mxu0 0.0
    %339 = vmatpush1.msra.mxu0 %v292
    %340 = vmatprep.subr.mxu0 0.0
    %341 = vmatpush1.msra.mxu0 %v293
    %342 = vmatprep.subr.mxu0 0.0
    %343 = vmatpush1.msra.mxu0 %v294
    %344 = vmatprep.subr.mxu0 0.0
    %345 = vmatpush1.msra.mxu0 %v295
    %346 = vmatprep.subr.mxu0 0.0
    %347 = vmatpush1.msra.mxu0 %v296
    %348 = vmatprep.subr.mxu0 0.0
    %349 = vmatpush1.msra.mxu0 %v297
    %350 = vmatprep.subr.mxu0 0.0
    %351 = vmatpush1.msra.mxu0 %v298
    %352 = vmatprep.subr.mxu0 0.0
    %353 = vmatpush1.msra.mxu0 %v299
    %354 = vmatprep.subr.mxu0 0.0
    %355 = vmatpush1.msra.mxu0 %v300
    %356 = vmatprep.subr.mxu0 0.0
    %357 = vmatpush1.msra.mxu0 %v301
    %358 = vmatprep.subr.mxu0 0.0
    %359 = vmatpush1.msra.mxu0 %v302
    %360 = vmatprep.subr.mxu0 0.0
    %361 = vmatpush1.msra.mxu0 %v303
    %362 = vmatprep.subr.mxu0 0.0
    %363 = vmatpush1.msra.mxu0 %v304
    %364 = vmatprep.subr.mxu0 0.0
    %365 = vmatpush1.msra.mxu0 %v305
    %366 = vmatprep.subr.mxu0 0.0
    %367 = vmatpush1.msra.mxu0 %v306
    %368 = vmatprep.subr.mxu0 0.0
    %369 = vmatpush1.msra.mxu0 %v307
    %370 = vmatprep.subr.mxu0 0.0
    %371 = vmatpush1.msra.mxu0 %v308
    %372 = vmatprep.subr.mxu0 0.0
    %373 = vmatpush1.msra.mxu0 0.0
    %374 = vmatprep.subr.mxu0 0.0
    %375 = vmatpush1.msra.mxu0 0.0
    %376 = vmatprep.subr.mxu0 0.0
    %377 = vmatpush1.msra.mxu0 0.0
    %378 = vmatprep.subr.mxu0 0.0
    %379 = vmatpush1.msra.mxu0 0.0
    %380 = vmatprep.subr.mxu0 0.0
    %381 = vmatpush1.msra.mxu0 0.0
    %382 = vmatprep.subr.mxu0 0.0
    %383 = vmatpush1.msra.mxu0 0.0
    %384 = vmatprep.subr.mxu0 0.0
    %385 = vmatpush1.msra.mxu0 0.0
    %386 = vmatprep.subr.mxu0 0.0
    %387 = vmatpush1.msra.mxu0 0.0
    %388 = vmatprep.mubr.f32.mxu0 %v316
    %389 = vmatmul.mubr.f32.gmra.mrb[0].mxu0 %v281
    %v390 = vpop.f32.mrb[0].mxu0
    %v391 = vadd.f32 %v314, %v390
    %v392 = vpop.f32.mrb[0].mxu0
    %393 = vmatprep.mubr.f32.mxu0 %v318
    %394 = vmatmul.mubr.f32.gmra.mrb[0].mxu0 %v282
    %v395 = vpop.f32.mrb[0].mxu0
    %v396 = vadd.f32 %v314, %v395
    %v397 = vpop.f32.mrb[0].mxu0
    %398 = vmatprep.mubr.f32.mxu0 %v320
    %399 = vmatmul.mubr.f32.gmra.mrb[0].mxu0 %v283
    %v400 = vpop.f32.mrb[0].mxu0
    %v401 = vadd.f32 %v314, %v400
    %v402 = vpop.f32.mrb[0].mxu0
    %403 = vmatprep.mubr.f32.mxu0 %v322
    %404 = vmatmul.mubr.f32.gmra.mrb[0].mxu0 %v284
    %v405 = vpop.f32.mrb[0].mxu0
    %v406 = vadd.f32 %v314, %v405
    %v407 = vpop.f32.mrb[0].mxu0
    %408 = vdwg.mxu0
    %v409 = vmax.f32 %v391, 0.0
    %v410 = vmax.f32 %v396, 0.0
    %v411 = vmax.f32 %v401, 0.0
    %v412 = vmax.f32 %v406, 0.0
    %v413 = vsel %vm280, %v409, 0.0
    %v414 = vsel %vm280, %v410, 0.0
    %v415 = vadd.f32 %v413, %v414
    %v416 = vrot.slane %v415, 4
    %v417 = vadd.f32 %v415, %v416
    %v418 = vrot.slane %v417, 2
    %v419 = vadd.f32 %v417, %v418
    %v420 = vrot.slane %v419, 1
    %v421 = vadd.f32 %v419, %v420
    %v422 = vsel %vm280, %v411, 0.0
    %v423 = vsel %vm280, %v412, 0.0
    %v424 = vadd.f32 %v422, %v423
    %v425 = vrot.slane %v424, 4
    %v426 = vadd.f32 %v424, %v425
    %v427 = vrot.slane %v426, 2
    %v428 = vadd.f32 %v426, %v427
    %v429 = vrot.slane %v428, 1
    %v430 = vadd.f32 %v428, %v429
    %v431 = vld [vmem:[%s5] sm:$0xff]
    %v432 = vld [vmem:[%s5 + $0x8] sm:$0xff]
    %v433 = vld [vmem:[%s5 + $0x10] sm:$0xff]
    %v434 = vld [vmem:[%s5 + $0x18] sm:$0xff]
    %v435 = vld [vmem:[%s5 + $0x20] sm:$0xff]
    %v436 = vld [vmem:[%s5 + $0x28] sm:$0xff]
    %v437 = vld [vmem:[%s5 + $0x30] sm:$0xff]
    %v438 = vld [vmem:[%s5 + $0x38] sm:$0xff]
    %v439 = vld [vmem:[%s6] sm:$0x1]
    %v441 = vlaneseq
    %v442 = vshrl.u32 %v441, 7
    %v443 = vsub.s32 0, %v442
    %v444 = vrot.slane %v439, %v443
    %vm448 = vcmask 1041409
    %v449 = vsel %vm448, %v430, %v421
    %v450 = vsel %vm280, %v449, 0
    %452 = vmatprep.subr.mxu0 0.0
    %453 = vmatpush1.msra.mxu0 %v431
    %454 = vmatprep.subr.mxu0 0.0
    %455 = vmatpush1.msra.mxu0 %v432
    %456 = vmatprep.subr.mxu0 0.0
    %457 = vmatpush1.msra.mxu0 %v433
    %458 = vmatprep.subr.mxu0 0.0
    %459 = vmatpush1.msra.mxu0 %v434
    %460 = vmatprep.subr.mxu0 0.0
    %461 = vmatpush1.msra.mxu0 %v435
    %462 = vmatprep.subr.mxu0 0.0
    %463 = vmatpush1.msra.mxu0 %v436
    %464 = vmatprep.subr.mxu0 0.0
    %465 = vmatpush1.msra.mxu0 %v437
    %466 = vmatprep.subr.mxu0 0.0
    %467 = vmatpush1.msra.mxu0 %v438
    %468 = vmatprep.subr.mxu0 0.0
    %469 = vmatpush1.msra.mxu0 0.0
    %470 = vmatprep.subr.mxu0 0.0
    %471 = vmatpush1.msra.mxu0 0.0
    %472 = vmatprep.subr.mxu0 0.0
    %473 = vmatpush1.msra.mxu0 0.0
    %474 = vmatprep.subr.mxu0 0.0
    %475 = vmatpush1.msra.mxu0 0.0
    %476 = vmatprep.subr.mxu0 0.0
    %477 = vmatpush1.msra.mxu0 0.0
    %478 = vmatprep.subr.mxu0 0.0
    %479 = vmatpush1.msra.mxu0 0.0
    %480 = vmatprep.subr.mxu0 0.0
    %481 = vmatpush1.msra.mxu0 0.0
    %482 = vmatprep.subr.mxu0 0.0
    %483 = vmatpush1.msra.mxu0 0.0
    %484 = vmatprep.subr.mxu0 0.0
    %485 = vmatpush1.msra.mxu0 0.0
    %486 = vmatprep.subr.mxu0 0.0
    %487 = vmatpush1.msra.mxu0 0.0
    %488 = vmatprep.subr.mxu0 0.0
    %489 = vmatpush1.msra.mxu0 0.0
    %490 = vmatprep.subr.mxu0 0.0
    %491 = vmatpush1.msra.mxu0 0.0
    %492 = vmatprep.subr.mxu0 0.0
    %493 = vmatpush1.msra.mxu0 0.0
    %494 = vmatprep.subr.mxu0 0.0
    %495 = vmatpush1.msra.mxu0 0.0
    %496 = vmatprep.subr.mxu0 0.0
    %497 = vmatpush1.msra.mxu0 0.0
    %498 = vmatprep.subr.mxu0 0.0
    %499 = vmatpush1.msra.mxu0 0.0
    %500 = vmatprep.subr.mxu0 0.0
    %501 = vmatpush1.msra.mxu0 0.0
    %502 = vmatprep.subr.mxu0 0.0
    %503 = vmatpush1.msra.mxu0 0.0
    %504 = vmatprep.subr.mxu0 0.0
    %505 = vmatpush1.msra.mxu0 0.0
    %506 = vmatprep.subr.mxu0 0.0
    %507 = vmatpush1.msra.mxu0 0.0
    %508 = vmatprep.subr.mxu0 0.0
    %509 = vmatpush1.msra.mxu0 0.0
    %510 = vmatprep.subr.mxu0 0.0
    %511 = vmatpush1.msra.mxu0 0.0
    %512 = vmatprep.subr.mxu0 0.0
    %513 = vmatpush1.msra.mxu0 0.0
    %514 = vmatprep.subr.mxu0 0.0
    %515 = vmatpush1.msra.mxu0 0.0
    %516 = vmatprep.mubr.f32.mxu0 0.0
    %517 = vmatmul.mubr.f32.gmra.mrb[0].mxu0 %v450
    %v518 = vpop.f32.mrb[0].mxu0
    %v519 = vadd.f32 %v444, %v518
    %v520 = vpop.f32.mrb[0].mxu0
    %521 = vdwg.mxu0
    %522 = vst [vmem:[#allocation2] sm:$0x3] %v519
    // Predicated region
    $region30: #{tpu_custom_call.1} parent=1 // pred_check
      _
    $region31: #{tpu_custom_call.1} parent=1 // pred_check_branch
      %524 = sbr.rel (0) target = $region33
    $region32: #{tpu_custom_call.1} parent=1 // pred_region
      %s526 = ssub.s32 32, 32
      %527 = vsyncadd [#allocation3], %s526
      %s529 = sshll.u32 [#allocation2], 4
      %s530 = int_to_ptr.vmem [resolvable:$true] %s529
      %532 = dma.vmem_to_hbm [thread:$0]  %s530, 32, %s7, [#allocation3]
    $region33: #{tpu_custom_call.1} parent=1 // pred_fallthru
      _
    // Predicated region
    $region34: #{tpu_custom_call.1} parent=1 // pred_check
      _
    $region35: #{tpu_custom_call.1} parent=1 // pred_check_branch
      %534 = sbr.rel (0) target = $region37
    $region36: #{tpu_custom_call.1} parent=1 // pred_region
      %535 = dma.done [#allocation3], 32
    $region37: #{tpu_custom_call.1} parent=1 // pred_fallthru
      _
    %536 = vsyncpa [#allocation3], 1

</llo_original>
